<compile_context>
chip_gen: v7x
topology: tpu7x:2x2x1
jax: 0.10.0
libtpu: 0.0.40
codegen_flags: <defaults>
</compile_context>

<pallas_src>
import functools

import jax
import jax.numpy as jnp
from jax.experimental import pallas as pl
from jax.experimental.pallas import tpu as pltpu

PHM_DIM = 4                    # hypercomplex_division
LN_EPS = 1e-5                  # torch.nn.LayerNorm default eps
LANE = 128
SUBLANE = 8


def _round_up(a, b):
    return (a + b - 1) // b * b


def _tpu_kind():
    try:
        return jax.devices()[0].device_kind.lower()
    except Exception:
        return ""


def _default_tm():
    kind = _tpu_kind()
    # v5e / v6e: 128 MiB VMEM, 1 TensorCore -> fat row tiles amortize per-step overhead.
    # v7x (and unknown): 64 MiB VMEM, 2 TensorCores -> smaller tiles, more grid steps.
    if "v5" in kind or "v6" in kind:
        return 512
    return 256


def _vmem_limit_bytes():
    try:
        cap = int(pltpu.get_tpu_info().vmem_capacity_bytes)
    except Exception:
        cap = 64 * 1024 * 1024
    # Leave headroom for Mosaic-internal scratch; never ask for more than 96 MiB.
    return min(cap * 3 // 4, 96 * 1024 * 1024)


DEFAULT_TM = _default_tm()
VMEM_LIMIT_BYTES = _vmem_limit_bytes()


def _probe_buffered():
    """Decide Buffered(1) support once, at import, via lowering only (no execution)."""
    if not hasattr(pl, "Buffered"):
        return None
    try:
        spec = pl.BlockSpec((SUBLANE, LANE), lambda i: (0, 0),
                            pipeline_mode=pl.Buffered(1))

        def _k(c_ref, o_ref):
            o_ref[...] = c_ref[...] * 2.0

        probe = pl.pallas_call(
            _k,
            out_shape=jax.ShapeDtypeStruct((SUBLANE, LANE), jnp.float32),
            grid=(1,),
            in_specs=[spec],
            out_specs=pl.BlockSpec((SUBLANE, LANE), lambda i: (0, 0)),
        )
        # Abstract lowering exercises the Pallas->Mosaic path without touching a chip.
        jax.jit(probe).lower(jax.ShapeDtypeStruct((SUBLANE, LANE), jnp.float32))
        return pl.Buffered(1)
    except Exception:
        return None


_CONST_PIPELINE_MODE = _probe_buffered()


def _phm_dense_weight(phm_rule, W):
    """Dense (in, out) weight: sum_n kron(phm_rule[n], W[n]).

    phm_rule: (p, p, p), W: (p, in/p, out/p) -> (in, out)
    H[a*ip + i, b*op + j] = sum_n phm_rule[n, a, b] * W[n, i, j]
    """
    p, ip, op = W.shape
    H = jnp.einsum("nab,nij->aibj", phm_rule, W)
    return H.reshape(p * ip, p * op)


def _pick_tm(M):
    tm = min(DEFAULT_TM, _round_up(M, SUBLANE))
    # Guarantee >= 2 row tiles whenever possible so both v7x TensorCores get work.
    if M > SUBLANE and pl.cdiv(M, tm) < 2:
        tm = max(SUBLANE, _round_up(pl.cdiv(M, 2), SUBLANE))
    return tm


def _phm_ff_kernel(x_ref, w1_ref, b1_ref, w2_ref, b2_ref, o_ref, *, d_real):
    x = x_ref[...].astype(jnp.float32)

    # Single-pass LayerNorm stats over the (zero-padded) feature axis. Padded
    # columns are zero, so the sums equal the sums over the d_real real columns.
    inv_d = jnp.float32(1.0 / d_real)
    mean = jnp.sum(x, axis=-1, keepdims=True) * inv_d
    mean_sq = jnp.sum(x * x, axis=-1, keepdims=True) * inv_d
    var = jnp.maximum(mean_sq - mean * mean, 0.0)
    xn = (x - mean) * jax.lax.rsqrt(var + LN_EPS)
    # gamma is folded into w1 offline (its padded rows are zero, so the non-zero
    # padded columns of xn never contribute); beta is folded into b1.

    # PHM linear #1: bf16 x bf16 on the MXU, f32 accumulate, f32 bias add.
    h = jnp.dot(xn.astype(jnp.bfloat16), w1_ref[...],
                preferred_element_type=jnp.float32) + b1_ref[...]

    # tanh GELU: the transcendental lands on the EUP slot instead of a VALU erf poly.
    h = jax.nn.gelu(h, approximate=True)

    # Dropout(p=0.0) is the identity.

    # PHM linear #2 + bias.
    y = jnp.dot(h.astype(jnp.bfloat16), w2_ref[...],
                preferred_element_type=jnp.float32) + b2_ref[...]

    o_ref[...] = y.astype(o_ref.dtype)


def _build_pallas_call(m_pad, d_pad, hd_pad, tm, out_dtype, d_real):
    const_kw = {}
    if _CONST_PIPELINE_MODE is not None:
        # Constant-index-map operands never change across the grid: single-buffer
        # them to halve their VMEM footprint.
        const_kw = dict(pipeline_mode=_CONST_PIPELINE_MODE)

    def const_spec(shape):
        return pl.BlockSpec(shape, lambda i: (0,) * len(shape), **const_kw)

    cost = pl.CostEstimate(
        flops=4 * m_pad * d_pad * hd_pad,                 # two MXU matmuls
        transcendentals=m_pad * (hd_pad + 1),             # tanh GELU + rsqrt per row
        bytes_accessed=(2 * m_pad * d_pad * 4             # x in + y out (f32)
                        + 2 * d_pad * hd_pad * 2          # bf16 kron weights
                        + (hd_pad + d_pad) * 4),          # biases
    )

    kernel = functools.partial(_phm_ff_kernel, d_real=d_real)
    return pl.pallas_call(
        kernel,
        out_shape=jax.ShapeDtypeStruct((m_pad, d_pad), out_dtype),
        grid=(m_pad // tm,),
        in_specs=[
            pl.BlockSpec((tm, d_pad), lambda i: (i, 0)),   # x rows
            const_spec((d_pad, hd_pad)),                   # W1' = gamma-folded kron weight (bf16)
            const_spec((1, hd_pad)),                       # b1' = b1 + beta @ H1
            const_spec((hd_pad, d_pad)),                   # W2 kron weight (bf16)
            const_spec((1, d_pad)),                        # b2
        ],
        out_specs=pl.BlockSpec((tm, d_pad), lambda i: (i, 0)),
        compiler_params=pltpu.CompilerParams(
            dimension_semantics=("parallel",),             # row tiles shard across TCs
            vmem_limit_bytes=VMEM_LIMIT_BYTES,
        ),
        cost_estimate=cost,
    )


def prepare_phm_ff_params(params):
    """Once-per-model constant prep: dense kron weights, LN affine folding, bf16 cast,
    lane padding. The returned dict is reused across every forward call."""
    gamma = params["gamma"].astype(jnp.float32)
    beta = params["beta"].astype(jnp.float32)
    D = gamma.shape[0]

    H1 = _phm_dense_weight(params["phm_rule1"].astype(jnp.float32),
                           params["W1"].astype(jnp.float32))        # (D, Hd)
    H2 = _phm_dense_weight(params["phm_rule2"].astype(jnp.float32),
                           params["W2"].astype(jnp.float32))        # (Hd, D)
    Hd = H1.shape[1]
    d_pad = _round_up(D, LANE)
    hd_pad = _round_up(Hd, LANE)

    # Fold LayerNorm affine into the first PHM linear (exact, in f32, before bf16 cast):
    #   xn*gamma @ H1 + beta @ H1 + b1  ==  xn @ (gamma[:,None]*H1) + (b1 + beta @ H1)
    W1f = gamma[:, None] * H1
    b1f = params["b1"].astype(jnp.float32) + beta @ H1

    w1 = jnp.zeros((d_pad, hd_pad), jnp.bfloat16).at[:D, :Hd].set(W1f.astype(jnp.bfloat16))
    b1 = jnp.zeros((1, hd_pad), jnp.float32).at[0, :Hd].set(b1f)
    w2 = jnp.zeros((hd_pad, d_pad), jnp.bfloat16).at[:Hd, :D].set(H2.astype(jnp.bfloat16))
    b2 = jnp.zeros((1, d_pad), jnp.float32).at[0, :D].set(params["b2"].astype(jnp.float32))
    return {"w1": w1, "b1": b1, "w2": w2, "b2": b2}


@jax.jit
def phm_feedforward(x, prep):
    """x: (B, N, D) float32. prep: output of prepare_phm_ff_params (cached per model)."""
    B, N, D = x.shape
    d_pad, hd_pad = prep["w1"].shape
    M = B * N
    tm = _pick_tm(M)
    m_pad = _round_up(M, tm)

    # jnp.pad inside jit: XLA fuses the pad / final slice; no zeros+scatter copy.
    x2d = jnp.pad(x.reshape(M, D), ((0, m_pad - M), (0, d_pad - D)))
    call = _build_pallas_call(m_pad, d_pad, hd_pad, tm, x.dtype, D)
    out2d = call(x2d, prep["w1"], prep["b1"], prep["w2"], prep["b2"])
    return out2d[:M, :D].reshape(B, N, D)


def make_params(key, dim, hidden_dim):
    """Deterministic synthetic PHM parameters (shapes match PHMLinear __init__)."""
    assert dim % PHM_DIM == 0 and hidden_dim % PHM_DIM == 0
    k = jax.random.split(key, 8)
    p = PHM_DIM
    # phm_rule: (phm_dim, phm_dim, phm_dim); c_init='normal' (larger std than the
    # original phm_init_range so the synthetic output is non-trivial).
    phm_rule1 = 0.1 * jax.random.normal(k[0], (p, p, p), jnp.float32)
    phm_rule2 = 0.1 * jax.random.normal(k[1], (p, p, p), jnp.float32)

    def glorot(key, shape):
        fan_in, fan_out = shape[1], shape[2]
        lim = (6.0 / (fan_in + fan_out)) ** 0.5
        return jax.random.uniform(key, shape, jnp.float32, -lim, lim)

    W1 = glorot(k[2], (p, dim // p, hidden_dim // p))
    W2 = glorot(k[3], (p, hidden_dim // p, dim // p))
    # Non-trivial LN affine and biases so the gamma/beta folding is exercised.
    gamma = 1.0 + 0.1 * jax.random.normal(k[4], (dim,), jnp.float32)
    beta = 0.1 * jax.random.normal(k[5], (dim,), jnp.float32)
    b1 = 0.05 * jax.random.normal(k[6], (hidden_dim,), jnp.float32)
    b2 = 0.05 * jax.random.normal(k[7], (dim,), jnp.float32)
    return {
        "gamma": gamma, "beta": beta,
        "phm_rule1": phm_rule1, "W1": W1, "b1": b1,
        "phm_rule2": phm_rule2, "W2": W2, "b2": b2,
    }


def _reference(x, params):
    """Pure-JAX f32 reference of the PyTorch forward pass (exact erf GELU)."""
    H1 = _phm_dense_weight(params["phm_rule1"], params["W1"])
    H2 = _phm_dense_weight(params["phm_rule2"], params["W2"])
    mean = jnp.mean(x, axis=-1, keepdims=True)
    var = jnp.mean((x - mean) ** 2, axis=-1, keepdims=True)
    xn = (x - mean) / jnp.sqrt(var + LN_EPS) * params["gamma"] + params["beta"]
    h = jax.nn.gelu(xn @ H1 + params["b1"], approximate=False)
    return h @ H2 + params["b2"]


if __name__ == "__main__":
    B, N, D, HID = 2, 8, 32, 64   # batch=2, seq=8, dim=32, hidden=64 (multiples of phm_dim=4)
    key = jax.random.PRNGKey(0)
    kx, kp = jax.random.split(key)
    x = jax.random.normal(kx, (B, N, D), jnp.float32)
    params = make_params(kp, D, HID)

    prep = prepare_phm_ff_params(params)          # once-per-model constant prep
    out = phm_feedforward(x, prep)
    out = jax.block_until_ready(out)

    ref = _reference(x, params)
    assert out.shape == (B, N, D)
    max_err = float(jnp.max(jnp.abs(out - ref)))
    # Tolerance accounts for bf16 kron weights / bf16 MXU activations (f32 accumulate)
    # and the tanh-GELU approximation (both well under 2e-2 at these magnitudes).
    assert jnp.allclose(out, ref, atol=2e-2, rtol=2e-2), (
        f"mismatch vs pure-JAX reference (max abs err {max_err})")
    print("KERNEL_OK")
</pallas_src>

<mosaic_0001>
module attributes {stable_mosaic.version = 11 : i64} {
  func.func @_phm_ff_kernel(%arg0: i32, %arg1: memref<8x128xf32, #tpu.memory_space<vmem>>, %arg2: memref<128x128xbf16, #tpu.memory_space<vmem>>, %arg3: memref<1x128xf32, #tpu.memory_space<vmem>>, %arg4: memref<128x128xbf16, #tpu.memory_space<vmem>>, %arg5: memref<1x128xf32, #tpu.memory_space<vmem>>, %arg6: memref<8x128xf32, #tpu.memory_space<vmem>>) attributes {dimension_semantics = [#tpu.dimension_semantics<parallel>], iteration_bounds = array<i64: 2>, scalar_prefetch = 0 : i64, scratch_operands = 0 : i64, tpu.core_type = #tpu.core_type<tc>, window_params = [{transform_indices = @transform_0, window_bounds = array<i64: 8, 128>}, {pipeline_mode = #tpu.pipeline_mode<synchronous>, transform_indices = @transform_1, window_bounds = array<i64: 128, 128>}, {pipeline_mode = #tpu.pipeline_mode<synchronous>, transform_indices = @transform_2, window_bounds = array<i64: 1, 128>}, {pipeline_mode = #tpu.pipeline_mode<synchronous>, transform_indices = @transform_3, window_bounds = array<i64: 128, 128>}, {pipeline_mode = #tpu.pipeline_mode<synchronous>, transform_indices = @transform_4, window_bounds = array<i64: 1, 128>}, {transform_indices = @transform_5, window_bounds = array<i64: 8, 128>}]} {
    %c0 = arith.constant 0 : index
    %c0_0 = arith.constant 0 : index
    %0 = vector.load %arg1[%c0, %c0_0] : memref<8x128xf32, #tpu.memory_space<vmem>>, vector<8x128xf32>
    %cst = arith.constant dense<0.000000e+00> : vector<8xf32>
    %1 = vector.multi_reduction <add>, %0, %cst [1] : vector<8x128xf32> to vector<8xf32>
    %2 = vector.shape_cast %1 : vector<8xf32> to vector<8x1xf32>
    %cst_1 = arith.constant 3.125000e-02 : f32
    %3 = vector.broadcast %cst_1 : f32 to vector<8x1xf32>
    %4 = arith.mulf %2, %3 : vector<8x1xf32>
    %5 = arith.mulf %0, %0 : vector<8x128xf32>
    %cst_2 = arith.constant dense<0.000000e+00> : vector<8xf32>
    %6 = vector.multi_reduction <add>, %5, %cst_2 [1] : vector<8x128xf32> to vector<8xf32>
    %7 = vector.shape_cast %6 : vector<8xf32> to vector<8x1xf32>
    %cst_3 = arith.constant 3.125000e-02 : f32
    %8 = vector.broadcast %cst_3 : f32 to vector<8x1xf32>
    %9 = arith.mulf %7, %8 : vector<8x1xf32>
    %10 = arith.mulf %4, %4 : vector<8x1xf32>
    %11 = arith.subf %9, %10 : vector<8x1xf32>
    %cst_4 = arith.constant 0.000000e+00 : f32
    %12 = vector.broadcast %cst_4 : f32 to vector<8x1xf32>
    %13 = arith.maximumf %11, %12 : vector<8x1xf32>
    %14 = vector.broadcast %4 : vector<8x1xf32> to vector<8x128xf32>
    %15 = arith.subf %0, %14 : vector<8x128xf32>
    %cst_5 = arith.constant 9.99999974E-6 : f32
    %16 = vector.broadcast %cst_5 : f32 to vector<8x1xf32>
    %17 = arith.addf %13, %16 : vector<8x1xf32>
    %18 = math.rsqrt %17 : vector<8x1xf32>
    %19 = vector.broadcast %18 : vector<8x1xf32> to vector<8x128xf32>
    %20 = arith.mulf %15, %19 : vector<8x128xf32>
    %21 = arith.truncf %20 : vector<8x128xf32> to vector<8x128xbf16>
    %c0_6 = arith.constant 0 : index
    %c0_7 = arith.constant 0 : index
    %22 = vector.load %arg2[%c0_6, %c0_7] : memref<128x128xbf16, #tpu.memory_space<vmem>>, vector<128x128xbf16>
    %cst_8 = arith.constant dense<0.000000e+00> : vector<8x128xf32>
    %23 = tpu.matmul %21, %22, %cst_8 {dimension_numbers = #tpu.dot_dimension_numbers<[1], [0], [0], [1], [0, 0, 1, 1], [], []>} : vector<8x128xbf16>, vector<128x128xbf16>, vector<8x128xf32> -> vector<8x128xf32>
    %c0_9 = arith.constant 0 : index
    %c0_10 = arith.constant 0 : index
    %24 = vector.load %arg3[%c0_9, %c0_10] : memref<1x128xf32, #tpu.memory_space<vmem>>, vector<1x128xf32>
    %25 = vector.broadcast %24 : vector<1x128xf32> to vector<8x128xf32>
    %26 = arith.addf %23, %25 : vector<8x128xf32>
    %27 = arith.mulf %26, %26 : vector<8x128xf32>
    %28 = arith.mulf %26, %27 : vector<8x128xf32>
    %cst_11 = arith.constant 4.471500e-02 : f32
    %29 = vector.broadcast %cst_11 : f32 to vector<8x128xf32>
    %30 = arith.mulf %29, %28 : vector<8x128xf32>
    %31 = arith.addf %26, %30 : vector<8x128xf32>
    %cst_12 = arith.constant 0.797884583 : f32
    %32 = vector.broadcast %cst_12 : f32 to vector<8x128xf32>
    %33 = arith.mulf %32, %31 : vector<8x128xf32>
    %34 = math.tanh %33 : vector<8x128xf32>
    %cst_13 = arith.constant 1.000000e+00 : f32
    %35 = vector.broadcast %cst_13 : f32 to vector<8x128xf32>
    %36 = arith.addf %35, %34 : vector<8x128xf32>
    %cst_14 = arith.constant 5.000000e-01 : f32
    %37 = vector.broadcast %cst_14 : f32 to vector<8x128xf32>
    %38 = arith.mulf %37, %36 : vector<8x128xf32>
    %39 = arith.mulf %26, %38 : vector<8x128xf32>
    %40 = arith.truncf %39 : vector<8x128xf32> to vector<8x128xbf16>
    %c0_15 = arith.constant 0 : index
    %c0_16 = arith.constant 0 : index
    %41 = vector.load %arg4[%c0_15, %c0_16] : memref<128x128xbf16, #tpu.memory_space<vmem>>, vector<128x128xbf16>
    %cst_17 = arith.constant dense<0.000000e+00> : vector<8x128xf32>
    %42 = tpu.matmul %40, %41, %cst_17 {dimension_numbers = #tpu.dot_dimension_numbers<[1], [0], [0], [1], [0, 0, 1, 1], [], []>} : vector<8x128xbf16>, vector<128x128xbf16>, vector<8x128xf32> -> vector<8x128xf32>
    %c0_18 = arith.constant 0 : index
    %c0_19 = arith.constant 0 : index
    %43 = vector.load %arg5[%c0_18, %c0_19] : memref<1x128xf32, #tpu.memory_space<vmem>>, vector<1x128xf32>
    %44 = vector.broadcast %43 : vector<1x128xf32> to vector<8x128xf32>
    %45 = arith.addf %42, %44 : vector<8x128xf32>
    %c0_20 = arith.constant 0 : index
    %c0_21 = arith.constant 0 : index
    %46 = vector.load %arg6[%c0_20, %c0_21] : memref<8x128xf32, #tpu.memory_space<vmem>>, vector<8x128xf32>
    tpu.vector_store %arg6[%c0_20, %c0_21], %45 {strides = array<i32>} : memref<8x128xf32, #tpu.memory_space<vmem>>, vector<8x128xf32>,
    return
  }
  func.func @transform_0(%arg0: i32) -> (i32, i32) {
    %c0_i32 = arith.constant 0 : i32
    %c0_i32_0 = arith.constant 0 : i32
    return %arg0, %c0_i32 : i32, i32
  }
  func.func @transform_1(%arg0: i32) -> (i32, i32) {
    %c0_i32 = arith.constant 0 : i32
    %c0_i32_0 = arith.constant 0 : i32
    %c0_i32_1 = arith.constant 0 : i32
    return %c0_i32, %c0_i32_0 : i32, i32
  }
  func.func @transform_2(%arg0: i32) -> (i32, i32) {
    %c0_i32 = arith.constant 0 : i32
    %c0_i32_0 = arith.constant 0 : i32
    %c0_i32_1 = arith.constant 0 : i32
    return %c0_i32, %c0_i32_0 : i32, i32
  }
  func.func @transform_3(%arg0: i32) -> (i32, i32) {
    %c0_i32 = arith.constant 0 : i32
    %c0_i32_0 = arith.constant 0 : i32
    %c0_i32_1 = arith.constant 0 : i32
    return %c0_i32, %c0_i32_0 : i32, i32
  }
  func.func @transform_4(%arg0: i32) -> (i32, i32) {
    %c0_i32 = arith.constant 0 : i32
    %c0_i32_0 = arith.constant 0 : i32
    %c0_i32_1 = arith.constant 0 : i32
    return %c0_i32, %c0_i32_0 : i32, i32
  }
  func.func @transform_5(%arg0: i32) -> (i32, i32) {
    %c0_i32 = arith.constant 0 : i32
    %c0_i32_0 = arith.constant 0 : i32
    return %arg0, %c0_i32 : i32, i32
  }
}

</mosaic_0001>

<llo_original>
// kernel: phm_feedforward.1
$region0: #{phm_feedforward.1}
  #allocation0 [shape = 'u32[]', space=smem, size = 0x4, offset = 0x4, fixed_abs, tag = 'smem constant byte address 0x4 - core index']
  #allocation1 [shape = 'u32[144,128]{1,0:T(1,128)}', space=vmem, size = 0x12000, scoped, tag = 'internal scratch']
  %s0 = inlined_call_operand.vmem [shape: f32[16,128], index: 0, kind: input, shape index: {}]
  %s1 = inlined_call_operand.hbm [shape: bf16[128,128], index: 1, kind: input, shape index: {}]
  %s2 = inlined_call_operand.vmem [shape: f32[1,128], index: 2, kind: input, shape index: {}]
  %s3 = inlined_call_operand.hbm [shape: bf16[128,128], index: 3, kind: input, shape index: {}]
  %s4 = inlined_call_operand.vmem [shape: f32[1,128], index: 4, kind: input, shape index: {}]
  %s5 = inlined_call_operand.vmem [shape: f32[16,128], index: 5, kind: output, shape index: {}]
  %s6 = sld [smem:[#allocation0]]
  $region61: #{phm_feedforward.1} parent=0
    _
  %s8 = ssub.s32 1, %s6
  %s9 = scalar_select 0, %s8, %s6
  $region1: #{phm_feedforward.1} parent=0
    #allocation2 [shape = 'u8[32768]{0}', space=vmem, size = 0x8000, scoped, tag = 'input window, operand 1, single buffered']
    #allocation3 [shape = 's32[2]{0}', space=sflag, size = 0x8, scoped, tag = 'scoped memory for phm_feedforward.1']
    #allocation4 [shape = 'u8[32768]{0}', space=vmem, size = 0x8000, scoped, tag = 'input window, operand 3, single buffered']
    #allocation5 [shape = 's32[1]{0}', space=sflag, size = 0x4, scoped, tag = 'scoped memory for phm_feedforward.1']
    %10 = vsyncpa [#allocation3], 0
    %11 = vsyncpa [#allocation5], 0
    loop: start=0, step=1, limit=4
    $region2: #{phm_feedforward.1} parent=1 // loop_pre_header
      _
    $region3: #{phm_feedforward.1} parent=1 // loop_header
      %s13 = sphi 0, %s17
      %p14 = scmp.ge.s32.totalorder %s13, 4
      %s23 = sphi 0, %s25
      %s26 = sphi 0, %s23
      %s27 = sphi 0, %s26
      %s43 = sphi 0, %s27
      %s47 = sphi 0, %s47
      %s49 = sphi 0, %s47
      %s50 = sphi 0, %s49
      %s64 = sphi 0, %s50
      %s68 = sphi 0, %s68
      %s70 = sphi 0, %s68
      %s71 = sphi 0, %s70
      %s85 = sphi 0, %s71
      %s89 = sphi 0, %s89
      %s91 = sphi 0, %s89
      %s92 = sphi 0, %s91
      %s106 = sphi 0, %s92
      %s110 = sphi 0, %s110
      %s112 = sphi 0, %s110
      %s113 = sphi 0, %s112
      %s127 = sphi 0, %s113
      %s133 = sphi 0, %s135
      %s136 = sphi 0, %s133
      %s137 = sphi 0, %s136
      %s153 = sphi 0, %s137
    $region4: #{phm_feedforward.1} parent=1 // loop_header_branch
      %16 = sbr.rel (%p14) target = $region8
    $region5: #{phm_feedforward.1} parent=1 // loop_body
      %s18 = ssub.s32 %s13, 1
      %s19 = ssub.s32 %s13, 2
      %s20 = sadd.s32 %s13, 1
      %s21 = ssub.s32 %s13, %s20
      %p22 = scmp.eq.s32.totalorder %s21, 0
      %s24 = sadd.s32 %s23, 1
      %s25 = scalar_select %p22, %s23, %s24
      %p28 = pneg %p22
      %p29 = scmp.eq.s32.totalorder %s13, 1
      %p30 = por %p28, %p29
      %p31 = scmp.ne.s32.totalorder %s23, %s26
      %p32 = scmp.eq.s32.totalorder %s13, 0
      %p33 = por %p31, %p32
      %p34 = scmp.ne.s32.totalorder %s23, %s26
      %p35 = scmp.eq.s32.totalorder %s18, 1
      %p36 = por %p34, %p35
      %p37 = scmp.ne.s32.totalorder %s26, %s27
      %p38 = scmp.eq.s32.totalorder %s18, 0
      %p39 = por %p37, %p38
      %p40 = scmp.ne.s32.totalorder %s26, %s27
      %p41 = scmp.eq.s32.totalorder %s19, 1
      %p42 = por %p40, %p41
      %p44 = scmp.ne.s32.totalorder %s27, %s43
      %p45 = scmp.eq.s32.totalorder %s19, 0
      %p46 = por %p44, %p45
      %s48 = sadd.s32 %s47, 1
      %p51 = scmp.eq.s32.totalorder %s13, 1
      %p52 = scmp.ne.s32.totalorder %s47, %s49
      %p53 = scmp.eq.s32.totalorder %s13, 0
      %p54 = por %p52, %p53
      %p55 = scmp.ne.s32.totalorder %s47, %s49
      %p56 = scmp.eq.s32.totalorder %s18, 1
      %p57 = por %p55, %p56
      %p58 = scmp.ne.s32.totalorder %s49, %s50
      %p59 = scmp.eq.s32.totalorder %s18, 0
      %p60 = por %p58, %p59
      %p61 = scmp.ne.s32.totalorder %s49, %s50
      %p62 = scmp.eq.s32.totalorder %s19, 1
      %p63 = por %p61, %p62
      %p65 = scmp.ne.s32.totalorder %s50, %s64
      %p66 = scmp.eq.s32.totalorder %s19, 0
      %p67 = por %p65, %p66
      %s69 = sadd.s32 %s68, 1
      %p72 = scmp.eq.s32.totalorder %s13, 1
      %p73 = scmp.ne.s32.totalorder %s68, %s70
      %p74 = scmp.eq.s32.totalorder %s13, 0
      %p75 = por %p73, %p74
      %p76 = scmp.ne.s32.totalorder %s68, %s70
      %p77 = scmp.eq.s32.totalorder %s18, 1
      %p78 = por %p76, %p77
      %p79 = scmp.ne.s32.totalorder %s70, %s71
      %p80 = scmp.eq.s32.totalorder %s18, 0
      %p81 = por %p79, %p80
      %p82 = scmp.ne.s32.totalorder %s70, %s71
      %p83 = scmp.eq.s32.totalorder %s19, 1
      %p84 = por %p82, %p83
      %p86 = scmp.ne.s32.totalorder %s71, %s85
      %p87 = scmp.eq.s32.totalorder %s19, 0
      %p88 = por %p86, %p87
      %s90 = sadd.s32 %s89, 1
      %p93 = scmp.eq.s32.totalorder %s13, 1
      %p94 = scmp.ne.s32.totalorder %s89, %s91
      %p95 = scmp.eq.s32.totalorder %s13, 0
      %p96 = por %p94, %p95
      %p97 = scmp.ne.s32.totalorder %s89, %s91
      %p98 = scmp.eq.s32.totalorder %s18, 1
      %p99 = por %p97, %p98
      %p100 = scmp.ne.s32.totalorder %s91, %s92
      %p101 = scmp.eq.s32.totalorder %s18, 0
      %p102 = por %p100, %p101
      %p103 = scmp.ne.s32.totalorder %s91, %s92
      %p104 = scmp.eq.s32.totalorder %s19, 1
      %p105 = por %p103, %p104
      %p107 = scmp.ne.s32.totalorder %s92, %s106
      %p108 = scmp.eq.s32.totalorder %s19, 0
      %p109 = por %p107, %p108
      %s111 = sadd.s32 %s110, 1
      %p114 = scmp.eq.s32.totalorder %s13, 1
      %p115 = scmp.ne.s32.totalorder %s110, %s112
      %p116 = scmp.eq.s32.totalorder %s13, 0
      %p117 = por %p115, %p116
      %p118 = scmp.ne.s32.totalorder %s110, %s112
      %p119 = scmp.eq.s32.totalorder %s18, 1
      %p120 = por %p118, %p119
      %p121 = scmp.ne.s32.totalorder %s112, %s113
      %p122 = scmp.eq.s32.totalorder %s18, 0
      %p123 = por %p121, %p122
      %p124 = scmp.ne.s32.totalorder %s112, %s113
      %p125 = scmp.eq.s32.totalorder %s19, 1
      %p126 = por %p124, %p125
      %p128 = scmp.ne.s32.totalorder %s113, %s127
      %p129 = scmp.eq.s32.totalorder %s19, 0
      %p130 = por %p128, %p129
      %s131 = ssub.s32 %s13, %s20
      %p132 = scmp.eq.s32.totalorder %s131, 0
      %s134 = sadd.s32 %s133, 1
      %s135 = scalar_select %p132, %s133, %s134
      %p138 = pneg %p132
      %p139 = scmp.eq.s32.totalorder %s13, 1
      %p140 = por %p138, %p139
      %p141 = scmp.ne.s32.totalorder %s133, %s136
      %p142 = scmp.eq.s32.totalorder %s13, 0
      %p143 = por %p141, %p142
      %p144 = scmp.ne.s32.totalorder %s133, %s136
      %p145 = scmp.eq.s32.totalorder %s18, 1
      %p146 = por %p144, %p145
      %p147 = scmp.ne.s32.totalorder %s136, %s137
      %p148 = scmp.eq.s32.totalorder %s18, 0
      %p149 = por %p147, %p148
      %p150 = scmp.ne.s32.totalorder %s136, %s137
      %p151 = scmp.eq.s32.totalorder %s19, 1
      %p152 = por %p150, %p151
      %p154 = scmp.ne.s32.totalorder %s137, %s153
      %p155 = scmp.eq.s32.totalorder %s19, 0
      %p156 = por %p154, %p155
      %p157 = scmp.le.s32.totalorder 1, %s13
      %p158 = scmp.lt.s32.totalorder %s13, 3
      %p159 = pnand %p157, %p158
      %p160 = pneg %p159
      // Predicated region
      $region9: #{phm_feedforward.1} parent=5 // pred_check
        _
      $region10: #{phm_feedforward.1} parent=5 // pred_check_branch
        %162 = sbr.rel (%p159) target = $region12
      $region11: #{phm_feedforward.1} parent=5 // pred_region
        %s163 = ssub.s32 %s13, 1
        // Predicated region
        $region13: #{phm_feedforward.1} parent=11 // pred_check
          %p164 = pneg %p60
        $region14: #{phm_feedforward.1} parent=11 // pred_check_branch
          %166 = sbr.rel (%p164) target = $region16
        $region15: #{phm_feedforward.1} parent=11 // pred_region
          %s168 = ssub.s32 1024, 1024
          %169 = vsyncadd [#allocation3], %s168
          %s170 = sshll.u32 [#allocation2], 4
          %s171 = int_to_ptr.vmem [resolvable:$true] %s170
          %176 = dma.hbm_to_vmem [thread:$0]  %s1, 1024, %s171, [#allocation3], 64, 64, 4
        $region16: #{phm_feedforward.1} parent=11 // pred_fallthru
          _
        // Predicated region
        $region17: #{phm_feedforward.1} parent=11 // pred_check
          %p177 = pneg %p81
        $region18: #{phm_feedforward.1} parent=11 // pred_check_branch
          %179 = sbr.rel (%p177) target = $region20
        $region19: #{phm_feedforward.1} parent=11 // pred_region
          _
        $region20: #{phm_feedforward.1} parent=11 // pred_fallthru
          _
        // Predicated region
        $region21: #{phm_feedforward.1} parent=11 // pred_check
          %p180 = pneg %p102
        $region22: #{phm_feedforward.1} parent=11 // pred_check_branch
          %182 = sbr.rel (%p180) target = $region24
        $region23: #{phm_feedforward.1} parent=11 // pred_region
          %s184 = ssub.s32 1024, 1024
          %185 = vsyncadd [#allocation5], %s184
          %s186 = sshll.u32 [#allocation4], 4
          %s187 = int_to_ptr.vmem [resolvable:$true] %s186
          %192 = dma.hbm_to_vmem [thread:$0]  %s3, 1024, %s187, [#allocation5], 64, 64, 4
        $region24: #{phm_feedforward.1} parent=11 // pred_fallthru
          _
        // Predicated region
        $region25: #{phm_feedforward.1} parent=11 // pred_check
          %p193 = pneg %p123
        $region26: #{phm_feedforward.1} parent=11 // pred_check_branch
          %195 = sbr.rel (%p193) target = $region28
        $region27: #{phm_feedforward.1} parent=11 // pred_region
          _
        $region28: #{phm_feedforward.1} parent=11 // pred_fallthru
          _
      $region12: #{phm_feedforward.1} parent=5 // pred_fallthru
        _
      %p196 = scmp.lt.s32.totalorder %s13, 2
      // Predicated region
      $region29: #{phm_feedforward.1} parent=5 // pred_check
        %p197 = pneg %p196
      $region30: #{phm_feedforward.1} parent=5 // pred_check_branch
        %199 = sbr.rel (%p197) target = $region32
      $region31: #{phm_feedforward.1} parent=5 // pred_region
        // Predicated region
        $region33: #{phm_feedforward.1} parent=31 // pred_check
          %p200 = pneg %p33
        $region34: #{phm_feedforward.1} parent=31 // pred_check_branch
          %202 = sbr.rel (%p200) target = $region36
        $region35: #{phm_feedforward.1} parent=31 // pred_region
          %p203 = scmp.lt.s32.totalorder %s13, 1
          %s204 = scalar_select %p203, %s13, 1
          %s205 = smul.addr %s204, 8
          %s206 = scalar_lea.vmem %s0, %s205
        $region36: #{phm_feedforward.1} parent=31 // pred_fallthru
          _
      $region32: #{phm_feedforward.1} parent=5 // pred_fallthru
        _
      %p207 = scmp.le.s32.totalorder 1, %s13
      %p208 = scmp.lt.s32.totalorder %s13, 3
      %p209 = pnand %p207, %p208
      %p210 = pneg %p209
      // Predicated region
      $region37: #{phm_feedforward.1} parent=5 // pred_check
        _
      $region38: #{phm_feedforward.1} parent=5 // pred_check_branch
        %212 = sbr.rel (%p209) target = $region40
      $region39: #{phm_feedforward.1} parent=5 // pred_region
        %s213 = ssub.s32 %s13, 1
        // Predicated region
        $region41: #{phm_feedforward.1} parent=39 // pred_check
          %p214 = pneg %p60
        $region42: #{phm_feedforward.1} parent=39 // pred_check_branch
          %216 = sbr.rel (%p214) target = $region44
        $region43: #{phm_feedforward.1} parent=39 // pred_region
          %217 = dma.done [#allocation3], 1024
        $region44: #{phm_feedforward.1} parent=39 // pred_fallthru
          _
        // Predicated region
        $region45: #{phm_feedforward.1} parent=39 // pred_check
          %p218 = pneg %p102
        $region46: #{phm_feedforward.1} parent=39 // pred_check_branch
          %220 = sbr.rel (%p218) target = $region48
        $region47: #{phm_feedforward.1} parent=39 // pred_region
          %221 = dma.done [#allocation5], 1024
        $region48: #{phm_feedforward.1} parent=39 // pred_fallthru
          _
        %p222 = scmp.lt.s32.totalorder %s18, 1
        %s223 = scalar_select %p222, %s18, 1
        %s224 = smul.addr %s223, 8
        %s225 = scalar_lea.vmem %s0, %s224
        %p226 = pneg %p39
        %p227 = pneg %p36
        %p228 = pneg %p60
        %p229 = pneg %p57
        %p230 = pneg %p81
        %p231 = pneg %p78
        %p232 = pneg %p102
        %p233 = pneg %p99
        %p234 = pneg %p123
        %p235 = pneg %p120
        %p236 = pneg %p149
        %p237 = pneg %p146
        %p238 = scmp.lt.s32.totalorder %s18, 1
        %s239 = scalar_select %p238, %s18, 1
        %s240 = smul.addr %s239, 8
        %s241 = scalar_lea.vmem %s5, %s240
        %p242 = scmp.lt.s32.totalorder %s18, 1
        %s243 = scalar_select %p242, %s18, 1
        %s244 = smul.addr %s243, 8
        %s245 = scalar_lea.vmem %s0, %s244
        %p246 = scmp.lt.s32.totalorder %s18, 1
        %s247 = scalar_select %p246, %s18, 1
        %s248 = smul.addr %s247, 8
        %s249 = scalar_lea.vmem %s5, %s248
        %v251 = vld [vmem:[%s245] sm:$0xff]
        %252 = vadd.xlane.f32.xlu0 %v251
        %v253 = vpop.xlane.xlu0 %252
        %v254 = vmul.f32 %v253, 0.03125
        %v255 = vmul.f32 %v251, %v251
        %256 = vadd.xlane.f32.xlu0 %v255
        %v257 = vpop.xlane.xlu0 %256
        %v258 = vmul.f32 %v257, 0.03125
        %v259 = vmul.f32 %v254, %v254
        %v260 = vsub.f32 %v258, %v259
        %v261 = vmax.f32 %v260, 0.0
        %v262 = vsub.f32 %v251, %v254
        %v263 = vadd.f32 %v261, 1e-05
        %v264 = vrsqrt.pop %v263
        %v265 = vmul.f32 %v262, %v264
        %v266 = vpack.c.bf16 %v265, %v265
        %v267 = vld [vmem:[#allocation2] sm:$0xf]
        %v268 = vld [vmem:[#allocation2 + $0x4] sm:$0xf]
        %v269 = vld [vmem:[#allocation2 + $0x8] sm:$0xf]
        %v270 = vld [vmem:[#allocation2 + $0xc] sm:$0xf]
        %v271 = vld [vmem:[#allocation2 + $0x10] sm:$0xf]
        %v272 = vld [vmem:[#allocation2 + $0x14] sm:$0xf]
        %v273 = vld [vmem:[#allocation2 + $0x18] sm:$0xf]
        %v274 = vld [vmem:[#allocation2 + $0x1c] sm:$0xf]
        %v275 = vld [vmem:[#allocation2 + $0x20] sm:$0xf]
        %v276 = vld [vmem:[#allocation2 + $0x24] sm:$0xf]
        %v277 = vld [vmem:[#allocation2 + $0x28] sm:$0xf]
        %v278 = vld [vmem:[#allocation2 + $0x2c] sm:$0xf]
        %v279 = vld [vmem:[#allocation2 + $0x30] sm:$0xf]
        %v280 = vld [vmem:[#allocation2 + $0x34] sm:$0xf]
        %v281 = vld [vmem:[#allocation2 + $0x38] sm:$0xf]
        %v282 = vld [vmem:[#allocation2 + $0x3c] sm:$0xf]
        %v283 = vld [vmem:[%s2] sm:$0x1]
        %v285 = vlaneseq
        %v286 = vshrl.u32 %v285, 7
        %v287 = vsub.s32 0, %v286
        %v288 = vrot.slane %v283, %v287
        %v306 = vunpack.c.l.b16 %v267
        %v307 = vunpack.c.l.b16 %v268
        %v308 = vunpack.c.l.b16 %v269
        %v309 = vunpack.c.l.b16 %v270
        %v310 = vunpack.c.l.b16 %v271
        %v311 = vunpack.c.l.b16 %v272
        %v312 = vunpack.c.l.b16 %v273
        %v313 = vunpack.c.l.b16 %v274
        %v314 = vunpack.c.l.b16 %v275
        %v315 = vunpack.c.l.b16 %v276
        %v316 = vunpack.c.l.b16 %v277
        %v317 = vunpack.c.l.b16 %v278
        %v318 = vunpack.c.l.b16 %v279
        %v319 = vunpack.c.l.b16 %v280
        %v320 = vunpack.c.l.b16 %v281
        %v321 = vunpack.c.l.b16 %v282
        %v322 = vpack.c.b16 %v307, %v306
        %v323 = vpack.c.b16 %v309, %v308
        %v324 = vpack.c.b16 %v311, %v310
        %v325 = vpack.c.b16 %v313, %v312
        %v326 = vpack.c.b16 %v315, %v314
        %v327 = vpack.c.b16 %v317, %v316
        %v328 = vpack.c.b16 %v319, %v318
        %v329 = vpack.c.b16 %v321, %v320
        %338 = vmatprep.subr.bf16.mxu0 0
        %339 = vmatpush1.bf16.msra.mxu0 %v322
        %340 = vmatprep.subr.bf16.mxu0 0
        %341 = vmatpush1.bf16.msra.mxu0 %v323
        %342 = vmatprep.subr.bf16.mxu0 0
        %343 = vmatpush1.bf16.msra.mxu0 %v324
        %344 = vmatprep.subr.bf16.mxu0 0
        %345 = vmatpush1.bf16.msra.mxu0 %v325
        %346 = vmatprep.subr.bf16.mxu0 0
        %347 = vmatpush1.bf16.msra.mxu0 %v326
        %348 = vmatprep.subr.bf16.mxu0 0
        %349 = vmatpush1.bf16.msra.mxu0 %v327
        %350 = vmatprep.subr.bf16.mxu0 0
        %351 = vmatpush1.bf16.msra.mxu0 %v328
        %352 = vmatprep.subr.bf16.mxu0 0
        %353 = vmatpush1.bf16.msra.mxu0 %v329
        %354 = vmatprep.subr.bf16.mxu0 0
        %355 = vmatpush1.bf16.msra.mxu0 0
        %356 = vmatprep.subr.bf16.mxu0 0
        %357 = vmatpush1.bf16.msra.mxu0 0
        %358 = vmatprep.subr.bf16.mxu0 0
        %359 = vmatpush1.bf16.msra.mxu0 0
        %360 = vmatprep.subr.bf16.mxu0 0
        %361 = vmatpush1.bf16.msra.mxu0 0
        %362 = vmatprep.subr.bf16.mxu0 0
        %363 = vmatpush1.bf16.msra.mxu0 0
        %364 = vmatprep.subr.bf16.mxu0 0
        %365 = vmatpush1.bf16.msra.mxu0 0
        %366 = vmatprep.subr.bf16.mxu0 0
        %367 = vmatpush1.bf16.msra.mxu0 0
        %368 = vmatprep.subr.bf16.mxu0 0
        %369 = vmatpush1.bf16.msra.mxu0 0
        %370 = vmatprep.mubr.bf16.mxu0 0
        %371 = vmatmul.mubr.bf16.gmra.mrb[0].mxu0 %v266
        %v372 = vpop.f32.mrb[0].mxu0
        %v373 = vadd.f32 %v288, %v372
        %v374 = vpop.f32.mrb[0].mxu0
        %v375 = vpop.f32.mrb[0].mxu0
        %v376 = vpop.f32.mrb[0].mxu0
        %377 = vdwg.mxu0
        %v378 = vmul.f32 %v373, %v373
        %v379 = vmul.f32 %v373, %v378
        %v380 = vmul.f32 %v379, 0.044715
        %v381 = vadd.f32 %v373, %v380
        %v382 = vmul.f32 %v381, 0.7978846
        %v383 = vtanh.pop %v382
        %v384 = vadd.f32 %v383, 1.0
        %v385 = vmul.f32 %v384, 0.5
        %v386 = vmul.f32 %v373, %v385
        %v387 = vpack.c.bf16 %v386, %v386
        %v388 = vld [vmem:[#allocation4] sm:$0xf]
        %v389 = vld [vmem:[#allocation4 + $0x4] sm:$0xf]
        %v390 = vld [vmem:[#allocation4 + $0x8] sm:$0xf]
        %v391 = vld [vmem:[#allocation4 + $0xc] sm:$0xf]
        %v392 = vld [vmem:[#allocation4 + $0x10] sm:$0xf]
        %v393 = vld [vmem:[#allocation4 + $0x14] sm:$0xf]
        %v394 = vld [vmem:[#allocation4 + $0x18] sm:$0xf]
        %v395 = vld [vmem:[#allocation4 + $0x1c] sm:$0xf]
        %v396 = vld [vmem:[#allocation4 + $0x20] sm:$0xf]
        %v397 = vld [vmem:[#allocation4 + $0x24] sm:$0xf]
        %v398 = vld [vmem:[#allocation4 + $0x28] sm:$0xf]
        %v399 = vld [vmem:[#allocation4 + $0x2c] sm:$0xf]
        %v400 = vld [vmem:[#allocation4 + $0x30] sm:$0xf]
        %v401 = vld [vmem:[#allocation4 + $0x34] sm:$0xf]
        %v402 = vld [vmem:[#allocation4 + $0x38] sm:$0xf]
        %v403 = vld [vmem:[#allocation4 + $0x3c] sm:$0xf]
        %v404 = vld [vmem:[%s4] sm:$0x1]
        %v406 = vlaneseq
        %v407 = vshrl.u32 %v406, 7
        %v408 = vsub.s32 0, %v407
        %v409 = vrot.slane %v404, %v408
        %v427 = vunpack.c.l.b16 %v388
        %v428 = vunpack.c.l.b16 %v389
        %v429 = vunpack.c.l.b16 %v390
        %v430 = vunpack.c.l.b16 %v391
        %v431 = vunpack.c.l.b16 %v392
        %v432 = vunpack.c.l.b16 %v393
        %v433 = vunpack.c.l.b16 %v394
        %v434 = vunpack.c.l.b16 %v395
        %v435 = vunpack.c.l.b16 %v396
        %v436 = vunpack.c.l.b16 %v397
        %v437 = vunpack.c.l.b16 %v398
        %v438 = vunpack.c.l.b16 %v399
        %v439 = vunpack.c.l.b16 %v400
        %v440 = vunpack.c.l.b16 %v401
        %v441 = vunpack.c.l.b16 %v402
        %v442 = vunpack.c.l.b16 %v403
        %v443 = vpack.c.b16 %v428, %v427
        %v444 = vpack.c.b16 %v430, %v429
        %v445 = vpack.c.b16 %v432, %v431
        %v446 = vpack.c.b16 %v434, %v433
        %v447 = vpack.c.b16 %v436, %v435
        %v448 = vpack.c.b16 %v438, %v437
        %v449 = vpack.c.b16 %v440, %v439
        %v450 = vpack.c.b16 %v442, %v441
        %459 = vmatprep.subr.bf16.mxu0 0
        %460 = vmatpush1.bf16.msra.mxu0 %v443
        %461 = vmatprep.subr.bf16.mxu0 0
        %462 = vmatpush1.bf16.msra.mxu0 %v444
        %463 = vmatprep.subr.bf16.mxu0 0
        %464 = vmatpush1.bf16.msra.mxu0 %v445
        %465 = vmatprep.subr.bf16.mxu0 0
        %466 = vmatpush1.bf16.msra.mxu0 %v446
        %467 = vmatprep.subr.bf16.mxu0 0
        %468 = vmatpush1.bf16.msra.mxu0 %v447
        %469 = vmatprep.subr.bf16.mxu0 0
        %470 = vmatpush1.bf16.msra.mxu0 %v448
        %471 = vmatprep.subr.bf16.mxu0 0
        %472 = vmatpush1.bf16.msra.mxu0 %v449
        %473 = vmatprep.subr.bf16.mxu0 0
        %474 = vmatpush1.bf16.msra.mxu0 %v450
        %475 = vmatprep.subr.bf16.mxu0 0
        %476 = vmatpush1.bf16.msra.mxu0 0
        %477 = vmatprep.subr.bf16.mxu0 0
        %478 = vmatpush1.bf16.msra.mxu0 0
        %479 = vmatprep.subr.bf16.mxu0 0
        %480 = vmatpush1.bf16.msra.mxu0 0
        %481 = vmatprep.subr.bf16.mxu0 0
        %482 = vmatpush1.bf16.msra.mxu0 0
        %483 = vmatprep.subr.bf16.mxu0 0
        %484 = vmatpush1.bf16.msra.mxu0 0
        %485 = vmatprep.subr.bf16.mxu0 0
        %486 = vmatpush1.bf16.msra.mxu0 0
        %487 = vmatprep.subr.bf16.mxu0 0
        %488 = vmatpush1.bf16.msra.mxu0 0
        %489 = vmatprep.subr.bf16.mxu0 0
        %490 = vmatpush1.bf16.msra.mxu0 0
        %491 = vmatprep.mubr.bf16.mxu0 0
        %492 = vmatmul.mubr.bf16.gmra.mrb[0].mxu0 %v387
        %v493 = vpop.f32.mrb[0].mxu0
        %v494 = vadd.f32 %v409, %v493
        %v495 = vpop.f32.mrb[0].mxu0
        %v496 = vpop.f32.mrb[0].mxu0
        %v497 = vpop.f32.mrb[0].mxu0
        %498 = vdwg.mxu0
        %499 = vst [vmem:[%s249] sm:$0xff] %v494
        %p500 = scmp.lt.s32.totalorder %s18, 1
        %s501 = scalar_select %p500, %s18, 1
        %s502 = smul.addr %s501, 8
        %s503 = scalar_lea.vmem %s5, %s502
        // Predicated region
        $region49: #{phm_feedforward.1} parent=39 // pred_check
          %p504 = pneg %p146
        $region50: #{phm_feedforward.1} parent=39 // pred_check_branch
          %506 = sbr.rel (%p504) target = $region52
        $region51: #{phm_feedforward.1} parent=39 // pred_region
          _
        $region52: #{phm_feedforward.1} parent=39 // pred_fallthru
          _
      $region40: #{phm_feedforward.1} parent=5 // pred_fallthru
        _
      %p507 = scmp.le.s32.totalorder 2, %s13
      // Predicated region
      $region53: #{phm_feedforward.1} parent=5 // pred_check
        %p508 = pneg %p507
      $region54: #{phm_feedforward.1} parent=5 // pred_check_branch
        %510 = sbr.rel (%p508) target = $region56
      $region55: #{phm_feedforward.1} parent=5 // pred_region
        %s511 = ssub.s32 %s13, 2
        // Predicated region
        $region57: #{phm_feedforward.1} parent=55 // pred_check
          %p512 = pneg %p152
        $region58: #{phm_feedforward.1} parent=55 // pred_check_branch
          %514 = sbr.rel (%p512) target = $region60
        $region59: #{phm_feedforward.1} parent=55 // pred_region
          %p515 = scmp.lt.s32.totalorder %s19, 1
          %s516 = scalar_select %p515, %s19, 1
          %s517 = smul.addr %s516, 8
          %s518 = scalar_lea.vmem %s5, %s517
        $region60: #{phm_feedforward.1} parent=55 // pred_fallthru
          _
      $region56: #{phm_feedforward.1} parent=5 // pred_fallthru
        _
    $region6: #{phm_feedforward.1} parent=1 // loop_footer
      %s17 = sadd.s32 1, %s13
    $region7: #{phm_feedforward.1} parent=1 // loop_footer_branch
      %12 = sbr.rel target = $region3
    $region8: #{phm_feedforward.1} parent=1 // loop_exit
      _
    %519 = vsyncpa [#allocation3], 1
    %s520 = scalar_lea.sflag [#allocation3], 1
    %521 = vsyncpa %s520, 1
    %522 = vsyncpa [#allocation5], 1

</llo_original>
